<compile_context>
chip_gen: v7x
topology: tpu7x:2x2x1
jax: 0.10.0
libtpu: 0.0.40
codegen_flags: <defaults>
</compile_context>

<pallas_src>
import functools

import jax
import jax.numpy as jnp
from jax.experimental import pallas as pl
from jax.experimental.pallas import tpu as pltpu


def _logofa_kernel(labels_ref, s_ref, t_ref, out_ref, *,
                   inv_temperature: float, eps: float, loss_weight: float):
    # s_ref / t_ref : (1, C, TW) logits tile (classes on sublanes, voxels on lanes)
    # labels_ref    : (1, 1, TW) int32 class indices
    # out_ref       : (1, 1, TW) per-voxel loss (lane-dense store)
    s = s_ref[...].astype(jnp.float32)
    t = t_ref[...].astype(jnp.float32)
    if inv_temperature != 1.0:          # trace-time constant; skipped when T == 1
        s = s * inv_temperature
        t = t * inv_temperature

    # Stable log-softmax of the student logits over the class (sublane) axis.
    s_max = jnp.max(s, axis=1, keepdims=True)
    s_shift = s - s_max
    s_sumexp = jnp.sum(jnp.exp(s_shift), axis=1, keepdims=True)
    log_pred_student = s_shift - jnp.log(s_sumexp)

    # Stable softmax of the teacher logits.  Exact reciprocal (one per voxel,
    # shape (1,1,TW)) then C broadcast multiplies: matches jax.nn.softmax to
    # f32 precision; the previous approx-EUP reciprocal was too coarse.
    t_max = jnp.max(t, axis=1, keepdims=True)
    t_exp = jnp.exp(t - t_max)
    t_denom = jnp.sum(t_exp, axis=1, keepdims=True)
    pred_teacher = t_exp * (1.0 / t_denom)

    # One-hot target mask built in-kernel from the integer labels.
    cls_idx = jax.lax.broadcasted_iota(jnp.int32, s.shape, 1)
    target_mask = (cls_idx == labels_ref[...]).astype(jnp.float32)

    # prod = (pred_teacher + target_mask) ** eps.  Special-case common eps at
    # trace time to avoid the exp+log pair hidden inside a general power.
    base = pred_teacher + target_mask
    if eps == 1.0:
        prod = base
    elif eps == 1.5:
        prod = base * jnp.sqrt(base)
    elif eps == 2.0:
        prod = base * base
    else:
        prod = jnp.power(base, eps)

    # loss = sum(-(prod - target_mask) * log(pred_student)) over the class axis.
    loss = jnp.sum((target_mask - prod) * log_pred_student, axis=1,
                   keepdims=True)
    out_ref[...] = (loss_weight * jnp.log(loss + 1.0)).astype(out_ref.dtype)


def _pick_lane_tile(dhw: int, c: int, max_lane_tile: int) -> int:
    # Keep a single (C, TW) f32 tile around ~2 MiB so double-buffered inputs
    # plus in-kernel temporaries stay far below every generation's VMEM limit
    # (v5e 16 MiB scoped default, v7x 64 MiB physical).
    budget_bytes = 2 * 1024 * 1024
    cap = (budget_bytes // (c * 4)) // 128 * 128
    cap = max(128, min(cap, max_lane_tile))
    if dhw <= cap:
        return dhw               # block == full array dim -> always legal
    return cap                   # multiple of 128; tail block handled by cdiv


def log_ofa_loss(logits_student, logits_teacher, label, *,
                 num_classes: int, temperature: float = 1.0,
                 eps: float = 1.5, loss_weight: float = 1.0,
                 max_lane_tile: int = 8192):
    """Pallas implementation of LogOFALoss.forward.

    logits_student, logits_teacher: [B, C, D, H, W] float (f32 or bf16)
    label: [B, D, H, W] integer class indices
    returns: [B*D*H*W] float32 per-voxel loss (same as the PyTorch module).
    """
    B, C, D, H, W = logits_student.shape
    assert C == num_classes
    assert logits_teacher.shape == logits_student.shape
    DHW = D * H * W
    N = B * DHW

    # Pure reshapes (no transpose / HBM copy): classes stay on axis 1.
    s = logits_student.reshape(B, C, DHW)
    t = logits_teacher.reshape(B, C, DHW)
    lbl = label.reshape(B, 1, DHW).astype(jnp.int32)

    tw = _pick_lane_tile(DHW, C, max_lane_tile)
    grid = (B, pl.cdiv(DHW, tw))     # cdiv: no divisibility constraint on DHW

    kernel = functools.partial(
        _logofa_kernel,
        inv_temperature=1.0 / float(temperature),
        eps=float(eps),
        loss_weight=float(loss_weight))

    itemsize = jnp.dtype(logits_student.dtype).itemsize
    cost = pl.CostEstimate(
        flops=10 * N * C,
        transcendentals=3 * N * C + 3 * N,
        bytes_accessed=2 * N * C * itemsize + N * 4 + N * 4)

    out = pl.pallas_call(
        kernel,
        out_shape=jax.ShapeDtypeStruct((B, 1, DHW), jnp.float32),
        grid_spec=pltpu.PrefetchScalarGridSpec(
            num_scalar_prefetch=0,
            grid=grid,
            in_specs=[
                pl.BlockSpec((1, 1, tw), lambda b, j: (b, 0, j)),   # labels
                pl.BlockSpec((1, C, tw), lambda b, j: (b, 0, j)),   # student
                pl.BlockSpec((1, C, tw), lambda b, j: (b, 0, j)),   # teacher
            ],
            out_specs=pl.BlockSpec((1, 1, tw), lambda b, j: (b, 0, j)),
        ),
        compiler_params=pltpu.CompilerParams(
            dimension_semantics=("parallel", "parallel"),
            vmem_limit_bytes=32 * 1024 * 1024),
        cost_estimate=cost,
    )(lbl, s, t)

    # Same row order as permute(0,2,3,4,1).view(-1, C) in the PyTorch module.
    return out.reshape(N)


def _reference(logits_student, logits_teacher, label, *,
               num_classes, temperature, eps, loss_weight):
    B, C, D, H, W = logits_student.shape
    N = B * D * H * W
    s = jnp.transpose(logits_student, (0, 2, 3, 4, 1)).reshape(N, C)
    t = jnp.transpose(logits_teacher, (0, 2, 3, 4, 1)).reshape(N, C)
    s = s.astype(jnp.float32)
    t = t.astype(jnp.float32)
    mask = jax.nn.one_hot(label.reshape(N), num_classes, dtype=jnp.float32)
    ps = jax.nn.softmax(s / temperature, axis=1)
    pt = jax.nn.softmax(t / temperature, axis=1)
    prod = (pt + mask) ** eps
    loss = jnp.sum(-(prod - mask) * jnp.log(ps), axis=-1)
    return loss_weight * jnp.log(loss + 1.0)


if __name__ == "__main__":
    # Small 3D-segmentation-like shapes: B=2, C=8 classes, D=4, H=8, W=8.
    B, C, D, H, W = 2, 8, 4, 8, 8
    num_classes = C
    temperature, eps, loss_weight = 1.0, 1.5, 1.0

    key = jax.random.PRNGKey(0)
    k1, k2, k3 = jax.random.split(key, 3)
    logits_student = jax.random.normal(k1, (B, C, D, H, W), dtype=jnp.float32)
    logits_teacher = jax.random.normal(k2, (B, C, D, H, W), dtype=jnp.float32)
    label = jax.random.randint(k3, (B, D, H, W), 0, num_classes, dtype=jnp.int32)

    out = log_ofa_loss(logits_student, logits_teacher, label,
                       num_classes=num_classes, temperature=temperature,
                       eps=eps, loss_weight=loss_weight)
    out = jax.block_until_ready(out)

    ref = _reference(logits_student, logits_teacher, label,
                     num_classes=num_classes, temperature=temperature,
                     eps=eps, loss_weight=loss_weight)

    assert out.shape == (B * D * H * W,)
    assert bool(jnp.allclose(out, ref, atol=1e-3, rtol=1e-3)), "mismatch vs reference"
    print("KERNEL_OK")
</pallas_src>

<mosaic_0001>
module attributes {stable_mosaic.version = 11 : i64} {
  func.func @_logofa_kernel(%arg0: i32, %arg1: i32, %arg2: memref<1x1x256xi32, #tpu.memory_space<vmem>>, %arg3: memref<1x8x256xf32, #tpu.memory_space<vmem>>, %arg4: memref<1x8x256xf32, #tpu.memory_space<vmem>>, %arg5: memref<1x1x256xf32, #tpu.memory_space<vmem>>) attributes {dimension_semantics = [#tpu.dimension_semantics<parallel>, #tpu.dimension_semantics<parallel>], iteration_bounds = array<i64: 2, 1>, scalar_prefetch = 0 : i64, scratch_operands = 0 : i64, tpu.core_type = #tpu.core_type<tc>, window_params = [{transform_indices = @transform_0, window_bounds = array<i64: 1, 1, 256>}, {transform_indices = @transform_1, window_bounds = array<i64: 1, 8, 256>}, {transform_indices = @transform_2, window_bounds = array<i64: 1, 8, 256>}, {transform_indices = @transform_3, window_bounds = array<i64: 1, 1, 256>}]} {
    %c0 = arith.constant 0 : index
    %c0_0 = arith.constant 0 : index
    %c0_1 = arith.constant 0 : index
    %0 = vector.load %arg3[%c0, %c0_0, %c0_1] : memref<1x8x256xf32, #tpu.memory_space<vmem>>, vector<1x8x256xf32>
    %c0_2 = arith.constant 0 : index
    %c0_3 = arith.constant 0 : index
    %c0_4 = arith.constant 0 : index
    %1 = vector.load %arg4[%c0_2, %c0_3, %c0_4] : memref<1x8x256xf32, #tpu.memory_space<vmem>>, vector<1x8x256xf32>
    %cst = arith.constant dense<0xFF800000> : vector<1x256xf32>
    %2 = vector.multi_reduction <maximumf>, %0, %cst [1] : vector<1x8x256xf32> to vector<1x256xf32>
    %3 = vector.shape_cast %2 : vector<1x256xf32> to vector<1x1x256xf32>
    %4 = vector.broadcast %3 : vector<1x1x256xf32> to vector<1x8x256xf32>
    %5 = arith.subf %0, %4 : vector<1x8x256xf32>
    %6 = math.exp %5 : vector<1x8x256xf32>
    %cst_5 = arith.constant dense<0.000000e+00> : vector<1x256xf32>
    %7 = vector.multi_reduction <add>, %6, %cst_5 [1] : vector<1x8x256xf32> to vector<1x256xf32>
    %8 = vector.shape_cast %7 : vector<1x256xf32> to vector<1x1x256xf32>
    %9 = math.log %8 : vector<1x1x256xf32>
    %10 = vector.broadcast %9 : vector<1x1x256xf32> to vector<1x8x256xf32>
    %11 = arith.subf %5, %10 : vector<1x8x256xf32>
    %cst_6 = arith.constant dense<0xFF800000> : vector<1x256xf32>
    %12 = vector.multi_reduction <maximumf>, %1, %cst_6 [1] : vector<1x8x256xf32> to vector<1x256xf32>
    %13 = vector.shape_cast %12 : vector<1x256xf32> to vector<1x1x256xf32>
    %14 = vector.broadcast %13 : vector<1x1x256xf32> to vector<1x8x256xf32>
    %15 = arith.subf %1, %14 : vector<1x8x256xf32>
    %16 = math.exp %15 : vector<1x8x256xf32>
    %cst_7 = arith.constant dense<0.000000e+00> : vector<1x256xf32>
    %17 = vector.multi_reduction <add>, %16, %cst_7 [1] : vector<1x8x256xf32> to vector<1x256xf32>
    %18 = vector.shape_cast %17 : vector<1x256xf32> to vector<1x1x256xf32>
    %cst_8 = arith.constant 1.000000e+00 : f32
    %19 = vector.broadcast %cst_8 : f32 to vector<1x1x256xf32>
    %20 = arith.divf %19, %18 : vector<1x1x256xf32>
    %21 = vector.broadcast %20 : vector<1x1x256xf32> to vector<1x8x256xf32>
    %22 = arith.mulf %16, %21 : vector<1x8x256xf32>
    %23 = tpu.iota {dimensions = array<i32: 1>} : vector<1x8x256xi32>
    %c0_9 = arith.constant 0 : index
    %c0_10 = arith.constant 0 : index
    %c0_11 = arith.constant 0 : index
    %24 = vector.load %arg2[%c0_9, %c0_10, %c0_11] : memref<1x1x256xi32, #tpu.memory_space<vmem>>, vector<1x1x256xi32>
    %25 = vector.broadcast %24 : vector<1x1x256xi32> to vector<1x8x256xi32>
    %26 = arith.cmpi eq, %23, %25 : vector<1x8x256xi32>
    %27 = arith.extui %26 : vector<1x8x256xi1> to vector<1x8x256xi32>
    %28 = arith.sitofp %27 : vector<1x8x256xi32> to vector<1x8x256xf32>
    %29 = arith.addf %22, %28 : vector<1x8x256xf32>
    %30 = math.sqrt %29 : vector<1x8x256xf32>
    %31 = arith.mulf %29, %30 : vector<1x8x256xf32>
    %32 = arith.subf %28, %31 : vector<1x8x256xf32>
    %33 = arith.mulf %32, %11 : vector<1x8x256xf32>
    %cst_12 = arith.constant dense<0.000000e+00> : vector<1x256xf32>
    %34 = vector.multi_reduction <add>, %33, %cst_12 [1] : vector<1x8x256xf32> to vector<1x256xf32>
    %35 = vector.shape_cast %34 : vector<1x256xf32> to vector<1x1x256xf32>
    %cst_13 = arith.constant 1.000000e+00 : f32
    %36 = vector.broadcast %cst_13 : f32 to vector<1x1x256xf32>
    %37 = arith.addf %35, %36 : vector<1x1x256xf32>
    %38 = math.log %37 : vector<1x1x256xf32>
    %cst_14 = arith.constant 1.000000e+00 : f32
    %39 = vector.broadcast %cst_14 : f32 to vector<1x1x256xf32>
    %40 = arith.mulf %39, %38 : vector<1x1x256xf32>
    %c0_15 = arith.constant 0 : index
    %c0_16 = arith.constant 0 : index
    %c0_17 = arith.constant 0 : index
    %41 = vector.load %arg5[%c0_15, %c0_16, %c0_17] : memref<1x1x256xf32, #tpu.memory_space<vmem>>, vector<1x1x256xf32>
    tpu.vector_store %arg5[%c0_15, %c0_16, %c0_17], %40 {strides = array<i32>} : memref<1x1x256xf32, #tpu.memory_space<vmem>>, vector<1x1x256xf32>,
    return
  }
  func.func @transform_0(%arg0: i32, %arg1: i32) -> (i32, i32, i32) {
    %c0_i32 = arith.constant 0 : i32
    %c0_i32_0 = arith.constant 0 : i32
    return %arg0, %c0_i32, %arg1 : i32, i32, i32
  }
  func.func @transform_1(%arg0: i32, %arg1: i32) -> (i32, i32, i32) {
    %c0_i32 = arith.constant 0 : i32
    %c0_i32_0 = arith.constant 0 : i32
    return %arg0, %c0_i32, %arg1 : i32, i32, i32
  }
  func.func @transform_2(%arg0: i32, %arg1: i32) -> (i32, i32, i32) {
    %c0_i32 = arith.constant 0 : i32
    %c0_i32_0 = arith.constant 0 : i32
    return %arg0, %c0_i32, %arg1 : i32, i32, i32
  }
  func.func @transform_3(%arg0: i32, %arg1: i32) -> (i32, i32, i32) {
    %c0_i32 = arith.constant 0 : i32
    %c0_i32_0 = arith.constant 0 : i32
    return %arg0, %c0_i32, %arg1 : i32, i32, i32
  }
}

</mosaic_0001>

<llo_original>
// kernel: tpu_custom_call.1
$region0: #{tpu_custom_call.1}
  #allocation0 [shape = 'u32[]', space=smem, size = 0x4, offset = 0x4, fixed_abs, tag = 'smem constant byte address 0x4 - core index']
  #allocation1 [shape = 'u32[144,128]{1,0:T(1,128)}', space=vmem, size = 0x12000, scoped, tag = 'internal scratch']
  %s0 = inlined_call_operand.hbm [shape: s32[2,1,256], index: 0, kind: input, shape index: {}]
  %s1 = inlined_call_operand.hbm [shape: f32[2,8,256], index: 1, kind: input, shape index: {}]
  %s2 = inlined_call_operand.hbm [shape: f32[2,8,256], index: 2, kind: input, shape index: {}]
  %s3 = inlined_call_operand.hbm [shape: f32[2,1,256], index: 3, kind: output, shape index: {}]
  %s4 = sld [smem:[#allocation0]]
  $region57: #{tpu_custom_call.1} parent=0
    _
  %s6 = ssub.s32 1, %s4
  %s7 = scalar_select 0, %s6, %s4
  $region1: #{tpu_custom_call.1} parent=0
    #allocation2 [shape = 'u8[2048]{0}', space=vmem, size = 0x800, scoped, tag = 'input window, operand 0']
    #allocation3 [shape = 's32[2]{0}', space=sflag, size = 0x8, scoped, tag = 'scoped memory for tpu_custom_call.1']
    #allocation4 [shape = 's32[2]{0}', space=sflag, size = 0x8, scoped, tag = 'scoped memory for tpu_custom_call.1']
    #allocation5 [shape = 'u8[16384]{0}', space=vmem, size = 0x4000, scoped, tag = 'input window, operand 1']
    #allocation6 [shape = 's32[2]{0}', space=sflag, size = 0x8, scoped, tag = 'scoped memory for tpu_custom_call.1']
    #allocation7 [shape = 'u8[16384]{0}', space=vmem, size = 0x4000, scoped, tag = 'input window, operand 2']
    #allocation8 [shape = 'u8[2048]{0}', space=vmem, size = 0x800, scoped, tag = 'output window, operand 0']
    %8 = vsyncpa [#allocation3], 0
    %s9 = scalar_lea.sflag [#allocation3], 1
    %10 = vsyncpa %s9, 0
    %11 = vsyncpa [#allocation6], 0
    %s12 = scalar_lea.sflag [#allocation6], 1
    %13 = vsyncpa %s12, 0
    %14 = vsyncpa [#allocation4], 0
    %s15 = scalar_lea.sflag [#allocation4], 1
    %16 = vsyncpa %s15, 0
    loop: start=0, step=1, limit=4
    $region2: #{tpu_custom_call.1} parent=1 // loop_pre_header
      _
    $region3: #{tpu_custom_call.1} parent=1 // loop_header
      %s18 = sphi 0, %s22
      %p19 = scmp.ge.s32.totalorder %s18, 4
      %s25 = sphi 0, %s37
      %s26 = sphi 0, %s33
      %s27 = sphi 0, %s25
      %s28 = sphi 0, %s26
      %s29 = sphi 0, %s27
      %s30 = sphi 0, %s28
      %s42 = sphi 0, %s44
      %s45 = sphi 0, %s42
      %s46 = sphi 0, %s45
      %s62 = sphi 0, %s46
      %s70 = sphi 0, %s72
      %s73 = sphi 0, %s70
      %s74 = sphi 0, %s73
      %s90 = sphi 0, %s74
      %s98 = sphi 0, %s100
      %s101 = sphi 0, %s98
      %s102 = sphi 0, %s101
      %s118 = sphi 0, %s102
      %s126 = sphi 0, %s128
      %s129 = sphi 0, %s126
      %s130 = sphi 0, %s129
      %s146 = sphi 0, %s130
    $region4: #{tpu_custom_call.1} parent=1 // loop_header_branch
      %21 = sbr.rel (%p19) target = $region8
    $region5: #{tpu_custom_call.1} parent=1 // loop_body
      %s23 = ssub.s32 %s18, 1
      %s24 = ssub.s32 %s18, 2
      %s31 = sadd.s32 1, %s26
      %p32 = scmp.ge.s32.totalorder %s31, 1
      %s33 = scalar_select %p32, 0, %s31
      %s34 = sadd.s32 1, %s25
      %s35 = scalar_select %p32, %s34, %s25
      %p36 = scmp.ge.s32.totalorder %s35, 2
      %s37 = scalar_select %p36, 0, %s35
      %s38 = ssub.s32 %s25, %s37
      %s39 = ssub.s32 %s26, %s33
      %s40 = sor.u32 %s38, %s39
      %p41 = scmp.eq.s32.totalorder %s40, 0
      %s43 = sadd.s32 %s42, 1
      %s44 = scalar_select %p41, %s42, %s43
      %p47 = pneg %p41
      %p48 = scmp.eq.s32.totalorder %s18, 1
      %p49 = por %p47, %p48
      %p50 = scmp.ne.s32.totalorder %s42, %s45
      %p51 = scmp.eq.s32.totalorder %s18, 0
      %p52 = por %p50, %p51
      %p53 = scmp.ne.s32.totalorder %s42, %s45
      %p54 = scmp.eq.s32.totalorder %s23, 1
      %p55 = por %p53, %p54
      %p56 = scmp.ne.s32.totalorder %s45, %s46
      %p57 = scmp.eq.s32.totalorder %s23, 0
      %p58 = por %p56, %p57
      %p59 = scmp.ne.s32.totalorder %s45, %s46
      %p60 = scmp.eq.s32.totalorder %s24, 1
      %p61 = por %p59, %p60
      %p63 = scmp.ne.s32.totalorder %s46, %s62
      %p64 = scmp.eq.s32.totalorder %s24, 0
      %p65 = por %p63, %p64
      %s66 = ssub.s32 %s25, %s37
      %s67 = ssub.s32 %s26, %s33
      %s68 = sor.u32 %s66, %s67
      %p69 = scmp.eq.s32.totalorder %s68, 0
      %s71 = sadd.s32 %s70, 1
      %s72 = scalar_select %p69, %s70, %s71
      %p75 = pneg %p69
      %p76 = scmp.eq.s32.totalorder %s18, 1
      %p77 = por %p75, %p76
      %p78 = scmp.ne.s32.totalorder %s70, %s73
      %p79 = scmp.eq.s32.totalorder %s18, 0
      %p80 = por %p78, %p79
      %p81 = scmp.ne.s32.totalorder %s70, %s73
      %p82 = scmp.eq.s32.totalorder %s23, 1
      %p83 = por %p81, %p82
      %p84 = scmp.ne.s32.totalorder %s73, %s74
      %p85 = scmp.eq.s32.totalorder %s23, 0
      %p86 = por %p84, %p85
      %p87 = scmp.ne.s32.totalorder %s73, %s74
      %p88 = scmp.eq.s32.totalorder %s24, 1
      %p89 = por %p87, %p88
      %p91 = scmp.ne.s32.totalorder %s74, %s90
      %p92 = scmp.eq.s32.totalorder %s24, 0
      %p93 = por %p91, %p92
      %s94 = ssub.s32 %s25, %s37
      %s95 = ssub.s32 %s26, %s33
      %s96 = sor.u32 %s94, %s95
      %p97 = scmp.eq.s32.totalorder %s96, 0
      %s99 = sadd.s32 %s98, 1
      %s100 = scalar_select %p97, %s98, %s99
      %p103 = pneg %p97
      %p104 = scmp.eq.s32.totalorder %s18, 1
      %p105 = por %p103, %p104
      %p106 = scmp.ne.s32.totalorder %s98, %s101
      %p107 = scmp.eq.s32.totalorder %s18, 0
      %p108 = por %p106, %p107
      %p109 = scmp.ne.s32.totalorder %s98, %s101
      %p110 = scmp.eq.s32.totalorder %s23, 1
      %p111 = por %p109, %p110
      %p112 = scmp.ne.s32.totalorder %s101, %s102
      %p113 = scmp.eq.s32.totalorder %s23, 0
      %p114 = por %p112, %p113
      %p115 = scmp.ne.s32.totalorder %s101, %s102
      %p116 = scmp.eq.s32.totalorder %s24, 1
      %p117 = por %p115, %p116
      %p119 = scmp.ne.s32.totalorder %s102, %s118
      %p120 = scmp.eq.s32.totalorder %s24, 0
      %p121 = por %p119, %p120
      %s122 = ssub.s32 %s25, %s37
      %s123 = ssub.s32 %s26, %s33
      %s124 = sor.u32 %s122, %s123
      %p125 = scmp.eq.s32.totalorder %s124, 0
      %s127 = sadd.s32 %s126, 1
      %s128 = scalar_select %p125, %s126, %s127
      %p131 = pneg %p125
      %p132 = scmp.eq.s32.totalorder %s18, 1
      %p133 = por %p131, %p132
      %p134 = scmp.ne.s32.totalorder %s126, %s129
      %p135 = scmp.eq.s32.totalorder %s18, 0
      %p136 = por %p134, %p135
      %p137 = scmp.ne.s32.totalorder %s126, %s129
      %p138 = scmp.eq.s32.totalorder %s23, 1
      %p139 = por %p137, %p138
      %p140 = scmp.ne.s32.totalorder %s129, %s130
      %p141 = scmp.eq.s32.totalorder %s23, 0
      %p142 = por %p140, %p141
      %p143 = scmp.ne.s32.totalorder %s129, %s130
      %p144 = scmp.eq.s32.totalorder %s24, 1
      %p145 = por %p143, %p144
      %p147 = scmp.ne.s32.totalorder %s130, %s146
      %p148 = scmp.eq.s32.totalorder %s24, 0
      %p149 = por %p147, %p148
      %p150 = scmp.le.s32.totalorder 1, %s18
      %p151 = scmp.lt.s32.totalorder %s18, 3
      %p152 = pnand %p150, %p151
      %p153 = pneg %p152
      // Predicated region
      $region9: #{tpu_custom_call.1} parent=5 // pred_check
        _
      $region10: #{tpu_custom_call.1} parent=5 // pred_check_branch
        %155 = sbr.rel (%p152) target = $region12
      $region11: #{tpu_custom_call.1} parent=5 // pred_region
        %s156 = ssub.s32 %s18, 1
      $region12: #{tpu_custom_call.1} parent=5 // pred_fallthru
        _
      %p157 = scmp.lt.s32.totalorder %s18, 2
      // Predicated region
      $region13: #{tpu_custom_call.1} parent=5 // pred_check
        %p158 = pneg %p157
      $region14: #{tpu_custom_call.1} parent=5 // pred_check_branch
        %160 = sbr.rel (%p158) target = $region16
      $region15: #{tpu_custom_call.1} parent=5 // pred_region
        // Predicated region
        $region17: #{tpu_custom_call.1} parent=15 // pred_check
          %p161 = pneg %p52
        $region18: #{tpu_custom_call.1} parent=15 // pred_check_branch
          %163 = sbr.rel (%p161) target = $region20
        $region19: #{tpu_custom_call.1} parent=15 // pred_region
          %s164 = sand.u32 %s42, 1
          %s165 = scalar_lea.sflag [#allocation3], %s164
          %s166 = sand.u32 %s42, 1
          %s167 = smul.addr %s166, 2
          %s168 = scalar_lea.vmem [#allocation2], %s167
          %s169 = smul.u32 2, %s26
          %s171 = ssub.s32 32, 32
          %172 = vsyncadd %s165, %s171
          %s173 = smul.addr %s25, 2
          %s174 = sadd.s32 %s169, %s173
          %s175 = smul.addr %s174, 16
          %s176 = scalar_lea.hbm %s0, %s175
          %s178 = sshll.u32 %s168, 4
          %s179 = int_to_ptr.vmem [resolvable:$true] %s178
          %181 = dma.hbm_to_vmem [thread:$0]  %s176, 32, %s179, %s165
        $region20: #{tpu_custom_call.1} parent=15 // pred_fallthru
          _
        // Predicated region
        $region21: #{tpu_custom_call.1} parent=15 // pred_check
          %p182 = pneg %p80
        $region22: #{tpu_custom_call.1} parent=15 // pred_check_branch
          %184 = sbr.rel (%p182) target = $region24
        $region23: #{tpu_custom_call.1} parent=15 // pred_region
          %s185 = sand.u32 %s18, 1
          %s186 = scalar_lea.sflag [#allocation6], %s185
          %s187 = sand.u32 %s70, 1
          %s188 = smul.addr %s187, 16
          %s189 = scalar_lea.vmem [#allocation5], %s188
          %s190 = smul.u32 2, %s26
          %s192 = ssub.s32 256, 256
          %193 = vsyncadd %s186, %s192
          %s194 = smul.addr %s25, 2
          %s195 = sadd.s32 %s190, %s194
          %s196 = smul.addr %s195, 128
          %s197 = scalar_lea.hbm %s1, %s196
          %s199 = sshll.u32 %s189, 4
          %s200 = int_to_ptr.vmem [resolvable:$true] %s199
          %202 = dma.hbm_to_vmem [thread:$0]  %s197, 256, %s200, %s186
        $region24: #{tpu_custom_call.1} parent=15 // pred_fallthru
          _
        // Predicated region
        $region25: #{tpu_custom_call.1} parent=15 // pred_check
          %p203 = pneg %p108
        $region26: #{tpu_custom_call.1} parent=15 // pred_check_branch
          %205 = sbr.rel (%p203) target = $region28
        $region27: #{tpu_custom_call.1} parent=15 // pred_region
          %s206 = sand.u32 %s18, 1
          %s207 = scalar_lea.sflag [#allocation6], %s206
          %s208 = sand.u32 %s98, 1
          %s209 = smul.addr %s208, 16
          %s210 = scalar_lea.vmem [#allocation7], %s209
          %s211 = smul.u32 2, %s26
          %s213 = ssub.s32 256, 256
          %214 = vsyncadd %s207, %s213
          %s215 = smul.addr %s25, 2
          %s216 = sadd.s32 %s211, %s215
          %s217 = smul.addr %s216, 128
          %s218 = scalar_lea.hbm %s2, %s217
          %s220 = sshll.u32 %s210, 4
          %s221 = int_to_ptr.vmem [resolvable:$true] %s220
          %223 = dma.hbm_to_vmem [thread:$0]  %s218, 256, %s221, %s207
        $region28: #{tpu_custom_call.1} parent=15 // pred_fallthru
          _
      $region16: #{tpu_custom_call.1} parent=5 // pred_fallthru
        _
      %p224 = scmp.le.s32.totalorder 1, %s18
      %p225 = scmp.lt.s32.totalorder %s18, 3
      %p226 = pnand %p224, %p225
      %p227 = pneg %p226
      // Predicated region
      $region29: #{tpu_custom_call.1} parent=5 // pred_check
        _
      $region30: #{tpu_custom_call.1} parent=5 // pred_check_branch
        %229 = sbr.rel (%p226) target = $region32
      $region31: #{tpu_custom_call.1} parent=5 // pred_region
        %s230 = ssub.s32 %s18, 1
        %s231 = sand.u32 %s45, 1
        %s232 = scalar_lea.sflag [#allocation3], %s231
        %s233 = sand.u32 %s45, 1
        %s234 = smul.addr %s233, 2
        %s235 = scalar_lea.vmem [#allocation2], %s234
        // Predicated region
        $region33: #{tpu_custom_call.1} parent=31 // pred_check
          %p236 = pneg %p58
        $region34: #{tpu_custom_call.1} parent=31 // pred_check_branch
          %238 = sbr.rel (%p236) target = $region36
        $region35: #{tpu_custom_call.1} parent=31 // pred_region
          %239 = dma.done %s232, 32
        $region36: #{tpu_custom_call.1} parent=31 // pred_fallthru
          _
        %s240 = sand.u32 %s23, 1
        %s241 = scalar_lea.sflag [#allocation6], %s240
        %s242 = sand.u32 %s73, 1
        %s243 = smul.addr %s242, 16
        %s244 = scalar_lea.vmem [#allocation5], %s243
        // Predicated region
        $region37: #{tpu_custom_call.1} parent=31 // pred_check
          %p245 = pneg %p86
        $region38: #{tpu_custom_call.1} parent=31 // pred_check_branch
          %247 = sbr.rel (%p245) target = $region40
        $region39: #{tpu_custom_call.1} parent=31 // pred_region
          %248 = dma.done %s241, 256
        $region40: #{tpu_custom_call.1} parent=31 // pred_fallthru
          _
        %s249 = sand.u32 %s23, 1
        %s250 = scalar_lea.sflag [#allocation6], %s249
        %s251 = sand.u32 %s101, 1
        %s252 = smul.addr %s251, 16
        %s253 = scalar_lea.vmem [#allocation7], %s252
        // Predicated region
        $region41: #{tpu_custom_call.1} parent=31 // pred_check
          %p254 = pneg %p114
        $region42: #{tpu_custom_call.1} parent=31 // pred_check_branch
          %256 = sbr.rel (%p254) target = $region44
        $region43: #{tpu_custom_call.1} parent=31 // pred_region
          %257 = dma.done %s250, 256
        $region44: #{tpu_custom_call.1} parent=31 // pred_fallthru
          _
        %s258 = sand.u32 %s45, 1
        %s259 = scalar_lea.sflag [#allocation3], %s258
        %s260 = sand.u32 %s45, 1
        %s261 = smul.addr %s260, 2
        %s262 = scalar_lea.vmem [#allocation2], %s261
        %p263 = pneg %p58
        %p264 = pneg %p55
        %s265 = sand.u32 %s23, 1
        %s266 = scalar_lea.sflag [#allocation6], %s265
        %s267 = sand.u32 %s73, 1
        %s268 = smul.addr %s267, 16
        %s269 = scalar_lea.vmem [#allocation5], %s268
        %p270 = pneg %p86
        %p271 = pneg %p83
        %s272 = sand.u32 %s23, 1
        %s273 = scalar_lea.sflag [#allocation6], %s272
        %s274 = sand.u32 %s101, 1
        %s275 = smul.addr %s274, 16
        %s276 = scalar_lea.vmem [#allocation7], %s275
        %p277 = pneg %p114
        %p278 = pneg %p111
        %p279 = pneg %p142
        %p280 = pneg %p139
        %s281 = sand.u32 %s129, 1
        %s282 = scalar_lea.sflag [#allocation4], %s281
        %s283 = sand.u32 %s129, 1
        %s284 = smul.addr %s283, 2
        %s285 = scalar_lea.vmem [#allocation8], %s284
        %s286 = smul.u32 2, %s28
        %s287 = smul.u32 2, %s28
        %s288 = smul.u32 2, %s28
        %s289 = smul.u32 2, %s28
        %v290 = vld [vmem:[%s244] sm:$0xff]
        %v291 = vld [vmem:[%s244 + $0x8] sm:$0xff]
        %v292 = vld [vmem:[%s253] sm:$0xff]
        %v293 = vld [vmem:[%s253 + $0x8] sm:$0xff]
        %v294 = vrot.slane %v290, 4
        %v295 = vmax.f32 %v290, %v294
        %v296 = vrot.slane %v295, 2
        %v297 = vmax.f32 %v295, %v296
        %v298 = vrot.slane %v297, 1
        %v299 = vmax.f32 %v297, %v298
        %v300 = vrot.slane %v291, 4
        %v301 = vmax.f32 %v291, %v300
        %v302 = vrot.slane %v301, 2
        %v303 = vmax.f32 %v301, %v302
        %v304 = vrot.slane %v303, 1
        %v305 = vmax.f32 %v303, %v304
        %v306 = vsub.f32 %v290, %v299
        %v307 = vsub.f32 %v291, %v305
        %v308 = vmul.f32 %v306, 1.442695
        %v309 = vpow.pop %v308
        %v310 = vmul.f32 %v307, 1.442695
        %v311 = vpow.pop %v310
        %v312 = vrot.slane %v309, 4
        %v313 = vadd.f32 %v309, %v312
        %v314 = vrot.slane %v313, 2
        %v315 = vadd.f32 %v313, %v314
        %v316 = vrot.slane %v315, 1
        %v317 = vadd.f32 %v315, %v316
        %v318 = vrot.slane %v311, 4
        %v319 = vadd.f32 %v311, %v318
        %v320 = vrot.slane %v319, 2
        %v321 = vadd.f32 %v319, %v320
        %v322 = vrot.slane %v321, 1
        %v323 = vadd.f32 %v321, %v322
        %v324 = vlog2.pop %v317
        %v325 = vmul.f32 %v324, 0.6931472
        %v326 = vlog2.pop %v323
        %v327 = vmul.f32 %v326, 0.6931472
        %v328 = vsub.f32 %v306, %v325
        %v329 = vsub.f32 %v307, %v327
        %v330 = vrot.slane %v292, 4
        %v331 = vmax.f32 %v292, %v330
        %v332 = vrot.slane %v331, 2
        %v333 = vmax.f32 %v331, %v332
        %v334 = vrot.slane %v333, 1
        %v335 = vmax.f32 %v333, %v334
        %v336 = vrot.slane %v293, 4
        %v337 = vmax.f32 %v293, %v336
        %v338 = vrot.slane %v337, 2
        %v339 = vmax.f32 %v337, %v338
        %v340 = vrot.slane %v339, 1
        %v341 = vmax.f32 %v339, %v340
        %v342 = vsub.f32 %v292, %v335
        %v343 = vsub.f32 %v293, %v341
        %v344 = vmul.f32 %v342, 1.442695
        %v345 = vpow.pop %v344
        %v346 = vmul.f32 %v343, 1.442695
        %v347 = vpow.pop %v346
        %v348 = vrot.slane %v345, 4
        %v349 = vadd.f32 %v345, %v348
        %v350 = vrot.slane %v349, 2
        %v351 = vadd.f32 %v349, %v350
        %v352 = vrot.slane %v351, 1
        %v353 = vadd.f32 %v351, %v352
        %v354 = vrot.slane %v347, 4
        %v355 = vadd.f32 %v347, %v354
        %v356 = vrot.slane %v355, 2
        %v357 = vadd.f32 %v355, %v356
        %v358 = vrot.slane %v357, 1
        %v359 = vadd.f32 %v357, %v358
        %v360 = vrcp.pop %v353
        %v361 = vmul.f32 1.0, %v360
        %v362 = vrcp.pop %v359
        %v363 = vmul.f32 1.0, %v362
        %v364 = vmul.f32 %v345, %v361
        %v365 = vmul.f32 %v347, %v363
        %v366 = vlaneseq
        %v367 = vshrl.u32 %v366, 7
        %v368 = vld [vmem:[%s235] sm:$0x3]
        %v369 = vlaneseq
        %v370 = vshrl.u32 %v369, 7
        %v371 = vsub.s32 0, %v370
        %v372 = vrot.slane %v368, %v371
        %v373 = vlaneseq
        %v374 = vshrl.u32 %v373, 7
        %v375 = vsub.s32 1, %v374
        %v376 = vrot.slane %v368, %v375
        %vm377 = vcmp.eq.s32.totalorder %v367, %v372
        %vm378 = vcmp.eq.s32.totalorder %v367, %v376
        %v379 = vsel %vm377, 1, 0
        %v380 = vsel %vm378, 1, 0
        %v381 = vcvt.s32.f32 %v379
        %v382 = vcvt.s32.f32 %v380
        %v383 = vadd.f32 %v364, %v381
        %v384 = vadd.f32 %v365, %v382
        %v385 = vrsqrt.pop %v383
        %v386 = vmul.f32 %v383, %v385
        %vm387 = vcmp.eq.f32.partialorder %v383, inf
        %v388 = vsel %vm387, %v383, %v386
        %vm389 = vcmp.eq.f32.partialorder %v383, 0.0
        %v390 = vand.u32 %v383, 2147483648
        %v391 = vsel %vm389, %v390, %v388
        %v392 = vrsqrt.pop %v384
        %v393 = vmul.f32 %v384, %v392
        %vm394 = vcmp.eq.f32.partialorder %v384, inf
        %v395 = vsel %vm394, %v384, %v393
        %vm396 = vcmp.eq.f32.partialorder %v384, 0.0
        %v397 = vand.u32 %v384, 2147483648
        %v398 = vsel %vm396, %v397, %v395
        %v399 = vmul.f32 %v383, %v391
        %v400 = vmul.f32 %v384, %v398
        %v401 = vsub.f32 %v381, %v399
        %v402 = vsub.f32 %v382, %v400
        %v403 = vmul.f32 %v401, %v328
        %v404 = vmul.f32 %v402, %v329
        %v405 = vrot.slane %v403, 4
        %v406 = vadd.f32 %v403, %v405
        %v407 = vrot.slane %v406, 2
        %v408 = vadd.f32 %v406, %v407
        %v409 = vrot.slane %v408, 1
        %v410 = vadd.f32 %v408, %v409
        %v411 = vrot.slane %v404, 4
        %v412 = vadd.f32 %v404, %v411
        %v413 = vrot.slane %v412, 2
        %v414 = vadd.f32 %v412, %v413
        %v415 = vrot.slane %v414, 1
        %v416 = vadd.f32 %v414, %v415
        %v417 = vadd.f32 %v410, 1.0
        %v418 = vadd.f32 %v416, 1.0
        %v419 = vlog2.pop %v417
        %v420 = vmul.f32 %v419, 0.6931472
        %v421 = vlog2.pop %v418
        %v422 = vmul.f32 %v421, 0.6931472
        %v425 = vcombine.low %v420, %v422
        %v427 = vunpack.c.l.s4 1966171168
        %v428 = vunpack.c.0.s8 %v427
        %v429 = vlaneseq
        %v430 = vshrl.u32 %v429, 7
        %v431 = vsub.s32 %v428, %v430
        %v432 = vrot.slane %v425, %v431
        %v434 = vunpack.c.l.s4 1966171168
        %v435 = vunpack.c.0.s8 %v434
        %v436 = vlaneseq
        %v437 = vshrl.u32 %v436, 7
        %v438 = vsub.s32 %v435, %v437
        %v439 = vrot.slane %v432, %v438
        %v441 = vlaneseq
        %vm442 = vcmp.ge.s32.totalorder %v441, 0
        %vm443 = vcmp.lt.s32.totalorder %v441, 256
        %vm444 = vmand %vm442, %vm443
        %445 = vst.msk [vmem:[%s285] sm:$0x3] %vm444, %v439
        %s446 = sand.u32 %s129, 1
        %s447 = scalar_lea.sflag [#allocation4], %s446
        %s448 = sand.u32 %s129, 1
        %s449 = smul.addr %s448, 2
        %s450 = scalar_lea.vmem [#allocation8], %s449
        // Predicated region
        $region45: #{tpu_custom_call.1} parent=31 // pred_check
          %p451 = pneg %p139
        $region46: #{tpu_custom_call.1} parent=31 // pred_check_branch
          %453 = sbr.rel (%p451) target = $region48
        $region47: #{tpu_custom_call.1} parent=31 // pred_region
          %s454 = smul.u32 2, %s28
          %s456 = ssub.s32 32, 32
          %457 = vsyncadd %s447, %s456
          %s458 = smul.addr %s27, 2
          %s459 = sadd.s32 %s454, %s458
          %s460 = smul.addr %s459, 16
          %s461 = scalar_lea.hbm %s3, %s460
          %s463 = sshll.u32 %s450, 4
          %s464 = int_to_ptr.vmem [resolvable:$true] %s463
          %466 = dma.vmem_to_hbm [thread:$0]  %s464, 32, %s461, %s447
        $region48: #{tpu_custom_call.1} parent=31 // pred_fallthru
          _
      $region32: #{tpu_custom_call.1} parent=5 // pred_fallthru
        _
      %p467 = scmp.le.s32.totalorder 2, %s18
      // Predicated region
      $region49: #{tpu_custom_call.1} parent=5 // pred_check
        %p468 = pneg %p467
      $region50: #{tpu_custom_call.1} parent=5 // pred_check_branch
        %470 = sbr.rel (%p468) target = $region52
      $region51: #{tpu_custom_call.1} parent=5 // pred_region
        %s471 = ssub.s32 %s18, 2
        // Predicated region
        $region53: #{tpu_custom_call.1} parent=51 // pred_check
          %p472 = pneg %p145
        $region54: #{tpu_custom_call.1} parent=51 // pred_check_branch
          %474 = sbr.rel (%p472) target = $region56
        $region55: #{tpu_custom_call.1} parent=51 // pred_region
          %s475 = sand.u32 %s130, 1
          %s476 = scalar_lea.sflag [#allocation4], %s475
          %s477 = sand.u32 %s130, 1
          %s478 = smul.addr %s477, 2
          %s479 = scalar_lea.vmem [#allocation8], %s478
          %480 = dma.done %s476, 32
        $region56: #{tpu_custom_call.1} parent=51 // pred_fallthru
          _
      $region52: #{tpu_custom_call.1} parent=5 // pred_fallthru
        _
    $region6: #{tpu_custom_call.1} parent=1 // loop_footer
      %s22 = sadd.s32 1, %s18
    $region7: #{tpu_custom_call.1} parent=1 // loop_footer_branch
      %17 = sbr.rel target = $region3
    $region8: #{tpu_custom_call.1} parent=1 // loop_exit
      _
    %481 = vsyncpa [#allocation3], 1
    %s482 = scalar_lea.sflag [#allocation3], 1
    %483 = vsyncpa %s482, 1
    %484 = vsyncpa [#allocation6], 1
    %s485 = scalar_lea.sflag [#allocation6], 1
    %486 = vsyncpa %s485, 1
    %487 = vsyncpa [#allocation4], 1
    %s488 = scalar_lea.sflag [#allocation4], 1
    %489 = vsyncpa %s488, 1

</llo_original>
